<compile_context>
chip_gen: v7x
topology: tpu7x:2x2x1
jax: 0.10.0
libtpu: 0.0.40
codegen_flags: <defaults>
</compile_context>

<pallas_src>
import functools
import math

import jax
import jax.numpy as jnp
from jax.experimental import pallas as pl
from jax.experimental.pallas import tpu as pltpu


def _round_up(x, m):
    return (x + m - 1) // m * m


def _cdiv(a, b):
    return -(-a // b)


def _softmax_readout_kernel(state_ref, wT_ref, *rest, compute_dtype, approx_recip,
                            has_bias):
    # state_ref: (tm, F_pad) native dtype; wT_ref: (F_pad, n_pad) compute dtype;
    # optional bias_ref: (1, n_pad) f32 (0 valid / -1e30 padded);
    # out_ref: (tm, n_pad) output dtype.
    if has_bias:
        bias_ref, out_ref = rest
    else:
        (out_ref,) = rest

    x = state_ref[...]
    if x.dtype != compute_dtype:
        x = x.astype(compute_dtype)          # in-kernel cast: cheap VPU op, no HBM pass

    # (tm, F_pad) @ (F_pad, n_pad) -> (tm, n_pad); f32 accumulation on the MXU.
    logits = jax.lax.dot_general(
        x, wT_ref[...],
        dimension_numbers=(((1,), (0,)), ((), ())),
        preferred_element_type=jnp.float32)

    if has_bias:
        logits = logits + bias_ref[...]      # masks padded readout columns (one vadd)

    m = jnp.max(logits, axis=-1, keepdims=True)
    e = jnp.exp(logits - m)
    denom = jnp.sum(e, axis=-1, keepdims=True)
    inv = pl.reciprocal(denom, approx=approx_recip)   # EUP slot
    out_ref[...] = (e * inv).astype(out_ref.dtype)


@functools.partial(jax.jit, static_argnames=("tm", "compute_dtype", "out_dtype"))
def softmax_readout(state, weight, *, tm=256, compute_dtype=jnp.bfloat16,
                    out_dtype=None):
    """state: (..., F), weight: (N, F) -> (..., N) softmax over the readout dim.

    Equivalent to SoftmaxReadout(n_readout=N, in_features=F, dim=-1).forward(state).
      tm            row-tile upper bound (sweep per shape; ~128 on v5e, 256+ v6e/v7x)
      compute_dtype MXU input dtype (bf16 default, f32 accumulation; pass
                    jnp.float32 for a bit-tight path)
      out_dtype     output dtype (default: state.dtype; bf16 halves writeback traffic)
    Note: with the default bf16 path, pl.reciprocal(approx=True) means rows sum
    to 1 only to ~2^-12 relative accuracy.
    """
    *lead, F = state.shape
    N, Fw = weight.shape
    assert F == Fw, "in_features mismatch"
    assert N >= 1, "n_readout must be >= 1 (softmax over an empty axis is undefined)"
    M = math.prod(lead) if lead else 1
    assert M >= 1, "empty batch not supported"

    compute_dtype = jnp.dtype(compute_dtype)
    out_dtype = jnp.dtype(state.dtype if out_dtype is None else out_dtype)

    # --- pad lane axes to multiples of 128 ---------------------------------
    n_pad = _round_up(N, 128)
    f_pad = _round_up(F, 128)

    # Weight: cast + zero-pad + transpose ONCE in the wrapper (tiny, amortized
    # over all row tiles). (F_pad, n_pad) is lane-dense on the readout dim.
    w = weight.astype(compute_dtype)
    if (n_pad != N) or (f_pad != F):
        w = jnp.pad(w, ((0, n_pad - N), (0, f_pad - F)))
    wT = w.T  # (f_pad, n_pad)

    # --- row tiling ---------------------------------------------------------
    sublane = 16 if compute_dtype == jnp.dtype(jnp.bfloat16) else 8
    tm = _round_up(max(tm, sublane), sublane)
    # Aim for >= 4 grid steps (>= 2 per TensorCore on 2-TC chips) when M allows.
    tm_eff = max(sublane, min(tm, _round_up(_cdiv(M, 4), sublane)))
    m_pad = _round_up(M, tm_eff)

    # State stays in its native dtype (cast happens in-kernel); only pad.
    state2d = state.reshape(M, F)
    if (m_pad != M) or (f_pad != F):
        state2d = jnp.pad(state2d, ((0, m_pad - M), (0, f_pad - F)))

    has_bias = n_pad != N
    inputs = [state2d, wT]
    in_specs = [
        pl.BlockSpec((tm_eff, f_pad), lambda i: (i, 0)),
        # Constant index map -> fetched once; Buffered(1) drops the useless second
        # pipeline buffer (biggest VMEM lever for large N*F, critical on v7x).
        pl.BlockSpec((f_pad, n_pad), lambda i: (0, 0),
                     pipeline_mode=pl.Buffered(1)),
    ]
    if has_bias:
        col = jnp.arange(n_pad, dtype=jnp.int32)[None, :]
        bias = jnp.where(col < N, 0.0, -1e30).astype(jnp.float32)   # (1, n_pad)
        inputs.append(bias)
        in_specs.append(pl.BlockSpec((1, n_pad), lambda i: (0, 0),
                                     pipeline_mode=pl.Buffered(1)))

    kernel = functools.partial(
        _softmax_readout_kernel,
        compute_dtype=compute_dtype,
        approx_recip=(compute_dtype != jnp.dtype(jnp.float32)),
        has_bias=has_bias)

    # --- VMEM budget: actual working set + headroom, capped for v7x ---------
    vmem_need = (
        2 * tm_eff * f_pad * state2d.dtype.itemsize      # state tile (double-buffered)
        + 1 * f_pad * n_pad * compute_dtype.itemsize     # resident weight (Buffered(1))
        + (n_pad * 4 if has_bias else 0)                 # bias row
        + 2 * tm_eff * n_pad * out_dtype.itemsize        # output tile (double-buffered)
        + 3 * tm_eff * n_pad * 4                         # f32 logits / exp temporaries
        + tm_eff * f_pad * compute_dtype.itemsize)       # in-kernel cast of state tile
    vmem_limit = max(8 << 20,
                     min(_round_up(int(vmem_need) * 3 // 2, 1 << 20), 48 << 20))

    out2d = pl.pallas_call(
        kernel,
        out_shape=jax.ShapeDtypeStruct((m_pad, n_pad), out_dtype),
        grid_spec=pltpu.PrefetchScalarGridSpec(
            num_scalar_prefetch=0,
            grid=(m_pad // tm_eff,),
            in_specs=in_specs,
            out_specs=pl.BlockSpec((tm_eff, n_pad), lambda i: (i, 0)),
        ),
        compiler_params=pltpu.CompilerParams(
            dimension_semantics=("parallel",),       # megacore-shardable M axis
            vmem_limit_bytes=vmem_limit),
    )(*inputs)

    out = out2d[:M, :N]
    return out.reshape(*lead, N)


def _reference(state, weight):
    logits = jnp.matmul(state, weight.T)
    return jax.nn.softmax(logits, axis=-1)


if __name__ == "__main__":
    # SoftmaxReadout(n_readout=16, in_features=32), state: (batch=2, seq=8, 32)
    batch, seq, in_features, n_readout = 2, 8, 32, 16

    key = jax.random.PRNGKey(0)
    k_state, k_weight = jax.random.split(key)
    state = jax.random.normal(k_state, (batch, seq, in_features), dtype=jnp.float32)
    # nn.Embedding initializes weight ~ N(0, 1), shape (n_readout, in_features)
    weight = jax.random.normal(k_weight, (n_readout, in_features), dtype=jnp.float32)

    ref = _reference(state, weight)

    # Exact (f32 MXU) path: tight tolerance.
    out_f32 = jax.block_until_ready(
        softmax_readout(state, weight, compute_dtype=jnp.float32))
    assert out_f32.shape == (batch, seq, n_readout)
    assert jnp.allclose(out_f32, ref, atol=1e-5, rtol=1e-5), "f32 path mismatch"

    # Default perf path (bf16 MXU inputs, f32 accumulation): relaxed tolerance.
    out_bf16 = jax.block_until_ready(softmax_readout(state, weight))
    assert out_bf16.shape == (batch, seq, n_readout)
    assert jnp.allclose(out_bf16, ref, atol=5e-2, rtol=5e-2), "bf16 path mismatch"

    print("KERNEL_OK")
</pallas_src>

<mosaic_0001>
module attributes {stable_mosaic.version = 11 : i64} {
  func.func @_softmax_readout_kernel(%arg0: i32, %arg1: memref<8x128xf32, #tpu.memory_space<vmem>>, %arg2: memref<128x128xf32, #tpu.memory_space<vmem>>, %arg3: memref<1x128xf32, #tpu.memory_space<vmem>>, %arg4: memref<8x128xf32, #tpu.memory_space<vmem>>) attributes {dimension_semantics = [#tpu.dimension_semantics<parallel>], iteration_bounds = array<i64: 2>, scalar_prefetch = 0 : i64, scratch_operands = 0 : i64, tpu.core_type = #tpu.core_type<tc>, window_params = [{transform_indices = @transform_0, window_bounds = array<i64: 8, 128>}, {pipeline_mode = #tpu.pipeline_mode<synchronous>, transform_indices = @transform_1, window_bounds = array<i64: 128, 128>}, {pipeline_mode = #tpu.pipeline_mode<synchronous>, transform_indices = @transform_2, window_bounds = array<i64: 1, 128>}, {transform_indices = @transform_3, window_bounds = array<i64: 8, 128>}]} {
    %c0 = arith.constant 0 : index
    %c0_0 = arith.constant 0 : index
    %0 = vector.load %arg1[%c0, %c0_0] : memref<8x128xf32, #tpu.memory_space<vmem>>, vector<8x128xf32>
    %c0_1 = arith.constant 0 : index
    %c0_2 = arith.constant 0 : index
    %1 = vector.load %arg2[%c0_1, %c0_2] : memref<128x128xf32, #tpu.memory_space<vmem>>, vector<128x128xf32>
    %cst = arith.constant dense<0.000000e+00> : vector<8x128xf32>
    %2 = tpu.matmul %0, %1, %cst {dimension_numbers = #tpu.dot_dimension_numbers<[1], [0], [0], [1], [0, 0, 1, 1], [], []>} : vector<8x128xf32>, vector<128x128xf32>, vector<8x128xf32> -> vector<8x128xf32>
    %c0_3 = arith.constant 0 : index
    %c0_4 = arith.constant 0 : index
    %3 = vector.load %arg3[%c0_3, %c0_4] : memref<1x128xf32, #tpu.memory_space<vmem>>, vector<1x128xf32>
    %4 = vector.broadcast %3 : vector<1x128xf32> to vector<8x128xf32>
    %5 = arith.addf %2, %4 : vector<8x128xf32>
    %cst_5 = arith.constant dense<0xFF800000> : vector<8xf32>
    %6 = vector.multi_reduction <maximumf>, %5, %cst_5 [1] : vector<8x128xf32> to vector<8xf32>
    %7 = vector.shape_cast %6 : vector<8xf32> to vector<8x1xf32>
    %8 = vector.broadcast %7 : vector<8x1xf32> to vector<8x128xf32>
    %9 = arith.subf %5, %8 : vector<8x128xf32>
    %10 = math.exp %9 : vector<8x128xf32>
    %cst_6 = arith.constant dense<0.000000e+00> : vector<8xf32>
    %11 = vector.multi_reduction <add>, %10, %cst_6 [1] : vector<8x128xf32> to vector<8xf32>
    %12 = vector.shape_cast %11 : vector<8xf32> to vector<8x1xf32>
    %13 = tpu.reciprocal %12 : vector<8x1xf32> -> vector<8x1xf32>
    %14 = vector.broadcast %13 : vector<8x1xf32> to vector<8x128xf32>
    %15 = arith.mulf %10, %14 : vector<8x128xf32>
    %c0_7 = arith.constant 0 : index
    %c0_8 = arith.constant 0 : index
    %16 = vector.load %arg4[%c0_7, %c0_8] : memref<8x128xf32, #tpu.memory_space<vmem>>, vector<8x128xf32>
    tpu.vector_store %arg4[%c0_7, %c0_8], %15 {strides = array<i32>} : memref<8x128xf32, #tpu.memory_space<vmem>>, vector<8x128xf32>,
    return
  }
  func.func @transform_0(%arg0: i32) -> (i32, i32) {
    %c0_i32 = arith.constant 0 : i32
    %c0_i32_0 = arith.constant 0 : i32
    return %arg0, %c0_i32 : i32, i32
  }
  func.func @transform_1(%arg0: i32) -> (i32, i32) {
    %c0_i32 = arith.constant 0 : i32
    %c0_i32_0 = arith.constant 0 : i32
    %c0_i32_1 = arith.constant 0 : i32
    return %c0_i32, %c0_i32_0 : i32, i32
  }
  func.func @transform_2(%arg0: i32) -> (i32, i32) {
    %c0_i32 = arith.constant 0 : i32
    %c0_i32_0 = arith.constant 0 : i32
    %c0_i32_1 = arith.constant 0 : i32
    return %c0_i32, %c0_i32_0 : i32, i32
  }
  func.func @transform_3(%arg0: i32) -> (i32, i32) {
    %c0_i32 = arith.constant 0 : i32
    %c0_i32_0 = arith.constant 0 : i32
    return %arg0, %c0_i32 : i32, i32
  }
}

</mosaic_0001>

<llo_original>
// kernel: softmax_readout.1
$region0: #{softmax_readout.1}
  #allocation0 [shape = 'u32[]', space=smem, size = 0x4, offset = 0x4, fixed_abs, tag = 'smem constant byte address 0x4 - core index']
  #allocation1 [shape = 'u32[144,128]{1,0:T(1,128)}', space=vmem, size = 0x12000, scoped, tag = 'internal scratch']
  %s0 = inlined_call_operand.vmem [shape: f32[16,128], index: 0, kind: input, shape index: {}]
  %s1 = inlined_call_operand.vmem [shape: f32[128,128], index: 1, kind: input, shape index: {}]
  %s2 = inlined_call_operand.vmem [shape: f32[1,128], index: 2, kind: input, shape index: {}]
  %s3 = inlined_call_operand.vmem [shape: f32[16,128], index: 3, kind: output, shape index: {}]
  %s4 = sld [smem:[#allocation0]]
  $region45: #{softmax_readout.1} parent=0
    _
  %s6 = ssub.s32 1, %s4
  %s7 = scalar_select 0, %s6, %s4
  loop: start=0, step=1, limit=4
  $region2: #{softmax_readout.1} parent=0 // loop_pre_header
    _
  $region3: #{softmax_readout.1} parent=0 // loop_header
    %s9 = sphi 0, %s13
    %p10 = scmp.ge.s32.totalorder %s9, 4
    %s19 = sphi 0, %s21
    %s22 = sphi 0, %s19
    %s23 = sphi 0, %s22
    %s39 = sphi 0, %s23
    %s43 = sphi 0, %s43
    %s45 = sphi 0, %s43
    %s46 = sphi 0, %s45
    %s60 = sphi 0, %s46
    %s64 = sphi 0, %s64
    %s66 = sphi 0, %s64
    %s67 = sphi 0, %s66
    %s81 = sphi 0, %s67
    %s87 = sphi 0, %s89
    %s90 = sphi 0, %s87
    %s91 = sphi 0, %s90
    %s107 = sphi 0, %s91
  $region4: #{softmax_readout.1} parent=0 // loop_header_branch
    %12 = sbr.rel (%p10) target = $region8
  $region5: #{softmax_readout.1} parent=0 // loop_body
    %s14 = ssub.s32 %s9, 1
    %s15 = ssub.s32 %s9, 2
    %s16 = sadd.s32 %s9, 1
    %s17 = ssub.s32 %s9, %s16
    %p18 = scmp.eq.s32.totalorder %s17, 0
    %s20 = sadd.s32 %s19, 1
    %s21 = scalar_select %p18, %s19, %s20
    %p24 = pneg %p18
    %p25 = scmp.eq.s32.totalorder %s9, 1
    %p26 = por %p24, %p25
    %p27 = scmp.ne.s32.totalorder %s19, %s22
    %p28 = scmp.eq.s32.totalorder %s9, 0
    %p29 = por %p27, %p28
    %p30 = scmp.ne.s32.totalorder %s19, %s22
    %p31 = scmp.eq.s32.totalorder %s14, 1
    %p32 = por %p30, %p31
    %p33 = scmp.ne.s32.totalorder %s22, %s23
    %p34 = scmp.eq.s32.totalorder %s14, 0
    %p35 = por %p33, %p34
    %p36 = scmp.ne.s32.totalorder %s22, %s23
    %p37 = scmp.eq.s32.totalorder %s15, 1
    %p38 = por %p36, %p37
    %p40 = scmp.ne.s32.totalorder %s23, %s39
    %p41 = scmp.eq.s32.totalorder %s15, 0
    %p42 = por %p40, %p41
    %s44 = sadd.s32 %s43, 1
    %p47 = scmp.eq.s32.totalorder %s9, 1
    %p48 = scmp.ne.s32.totalorder %s43, %s45
    %p49 = scmp.eq.s32.totalorder %s9, 0
    %p50 = por %p48, %p49
    %p51 = scmp.ne.s32.totalorder %s43, %s45
    %p52 = scmp.eq.s32.totalorder %s14, 1
    %p53 = por %p51, %p52
    %p54 = scmp.ne.s32.totalorder %s45, %s46
    %p55 = scmp.eq.s32.totalorder %s14, 0
    %p56 = por %p54, %p55
    %p57 = scmp.ne.s32.totalorder %s45, %s46
    %p58 = scmp.eq.s32.totalorder %s15, 1
    %p59 = por %p57, %p58
    %p61 = scmp.ne.s32.totalorder %s46, %s60
    %p62 = scmp.eq.s32.totalorder %s15, 0
    %p63 = por %p61, %p62
    %s65 = sadd.s32 %s64, 1
    %p68 = scmp.eq.s32.totalorder %s9, 1
    %p69 = scmp.ne.s32.totalorder %s64, %s66
    %p70 = scmp.eq.s32.totalorder %s9, 0
    %p71 = por %p69, %p70
    %p72 = scmp.ne.s32.totalorder %s64, %s66
    %p73 = scmp.eq.s32.totalorder %s14, 1
    %p74 = por %p72, %p73
    %p75 = scmp.ne.s32.totalorder %s66, %s67
    %p76 = scmp.eq.s32.totalorder %s14, 0
    %p77 = por %p75, %p76
    %p78 = scmp.ne.s32.totalorder %s66, %s67
    %p79 = scmp.eq.s32.totalorder %s15, 1
    %p80 = por %p78, %p79
    %p82 = scmp.ne.s32.totalorder %s67, %s81
    %p83 = scmp.eq.s32.totalorder %s15, 0
    %p84 = por %p82, %p83
    %s85 = ssub.s32 %s9, %s16
    %p86 = scmp.eq.s32.totalorder %s85, 0
    %s88 = sadd.s32 %s87, 1
    %s89 = scalar_select %p86, %s87, %s88
    %p92 = pneg %p86
    %p93 = scmp.eq.s32.totalorder %s9, 1
    %p94 = por %p92, %p93
    %p95 = scmp.ne.s32.totalorder %s87, %s90
    %p96 = scmp.eq.s32.totalorder %s9, 0
    %p97 = por %p95, %p96
    %p98 = scmp.ne.s32.totalorder %s87, %s90
    %p99 = scmp.eq.s32.totalorder %s14, 1
    %p100 = por %p98, %p99
    %p101 = scmp.ne.s32.totalorder %s90, %s91
    %p102 = scmp.eq.s32.totalorder %s14, 0
    %p103 = por %p101, %p102
    %p104 = scmp.ne.s32.totalorder %s90, %s91
    %p105 = scmp.eq.s32.totalorder %s15, 1
    %p106 = por %p104, %p105
    %p108 = scmp.ne.s32.totalorder %s91, %s107
    %p109 = scmp.eq.s32.totalorder %s15, 0
    %p110 = por %p108, %p109
    %p111 = scmp.le.s32.totalorder 1, %s9
    %p112 = scmp.lt.s32.totalorder %s9, 3
    %p113 = pnand %p111, %p112
    %p114 = pneg %p113
    // Predicated region
    $region9: #{softmax_readout.1} parent=5 // pred_check
      _
    $region10: #{softmax_readout.1} parent=5 // pred_check_branch
      %116 = sbr.rel (%p113) target = $region12
    $region11: #{softmax_readout.1} parent=5 // pred_region
      %s117 = ssub.s32 %s9, 1
      // Predicated region
      $region13: #{softmax_readout.1} parent=11 // pred_check
        %p118 = pneg %p56
      $region14: #{softmax_readout.1} parent=11 // pred_check_branch
        %120 = sbr.rel (%p118) target = $region16
      $region15: #{softmax_readout.1} parent=11 // pred_region
        _
      $region16: #{softmax_readout.1} parent=11 // pred_fallthru
        _
      // Predicated region
      $region17: #{softmax_readout.1} parent=11 // pred_check
        %p121 = pneg %p77
      $region18: #{softmax_readout.1} parent=11 // pred_check_branch
        %123 = sbr.rel (%p121) target = $region20
      $region19: #{softmax_readout.1} parent=11 // pred_region
        _
      $region20: #{softmax_readout.1} parent=11 // pred_fallthru
        _
    $region12: #{softmax_readout.1} parent=5 // pred_fallthru
      _
    %p124 = scmp.lt.s32.totalorder %s9, 2
    // Predicated region
    $region21: #{softmax_readout.1} parent=5 // pred_check
      %p125 = pneg %p124
    $region22: #{softmax_readout.1} parent=5 // pred_check_branch
      %127 = sbr.rel (%p125) target = $region24
    $region23: #{softmax_readout.1} parent=5 // pred_region
      // Predicated region
      $region25: #{softmax_readout.1} parent=23 // pred_check
        %p128 = pneg %p29
      $region26: #{softmax_readout.1} parent=23 // pred_check_branch
        %130 = sbr.rel (%p128) target = $region28
      $region27: #{softmax_readout.1} parent=23 // pred_region
        %p131 = scmp.lt.s32.totalorder %s9, 1
        %s132 = scalar_select %p131, %s9, 1
        %s133 = smul.addr %s132, 8
        %s134 = scalar_lea.vmem %s0, %s133
      $region28: #{softmax_readout.1} parent=23 // pred_fallthru
        _
    $region24: #{softmax_readout.1} parent=5 // pred_fallthru
      _
    %p135 = scmp.le.s32.totalorder 1, %s9
    %p136 = scmp.lt.s32.totalorder %s9, 3
    %p137 = pnand %p135, %p136
    %p138 = pneg %p137
    // Predicated region
    $region29: #{softmax_readout.1} parent=5 // pred_check
      _
    $region30: #{softmax_readout.1} parent=5 // pred_check_branch
      %140 = sbr.rel (%p137) target = $region32
    $region31: #{softmax_readout.1} parent=5 // pred_region
      %s141 = ssub.s32 %s9, 1
      %p142 = scmp.lt.s32.totalorder %s14, 1
      %s143 = scalar_select %p142, %s14, 1
      %s144 = smul.addr %s143, 8
      %s145 = scalar_lea.vmem %s0, %s144
      %p146 = pneg %p35
      %p147 = pneg %p32
      %p148 = pneg %p56
      %p149 = pneg %p53
      %p150 = pneg %p77
      %p151 = pneg %p74
      %p152 = pneg %p103
      %p153 = pneg %p100
      %p154 = scmp.lt.s32.totalorder %s14, 1
      %s155 = scalar_select %p154, %s14, 1
      %s156 = smul.addr %s155, 8
      %s157 = scalar_lea.vmem %s3, %s156
      %p158 = scmp.lt.s32.totalorder %s14, 1
      %s159 = scalar_select %p158, %s14, 1
      %s160 = smul.addr %s159, 8
      %s161 = scalar_lea.vmem %s0, %s160
      %p162 = scmp.lt.s32.totalorder %s14, 1
      %s163 = scalar_select %p162, %s14, 1
      %s164 = smul.addr %s163, 8
      %s165 = scalar_lea.vmem %s3, %s164
      %v166 = vld [vmem:[%s161] sm:$0xff]
      %v167 = vld [vmem:[%s1] sm:$0xff]
      %v168 = vld [vmem:[%s1 + $0x8] sm:$0xff]
      %v169 = vld [vmem:[%s1 + $0x10] sm:$0xff]
      %v170 = vld [vmem:[%s1 + $0x18] sm:$0xff]
      %v171 = vld [vmem:[%s1 + $0x20] sm:$0xff]
      %v172 = vld [vmem:[%s1 + $0x28] sm:$0xff]
      %v173 = vld [vmem:[%s1 + $0x30] sm:$0xff]
      %v174 = vld [vmem:[%s1 + $0x38] sm:$0xff]
      %v175 = vld [vmem:[%s1 + $0x40] sm:$0xff]
      %v176 = vld [vmem:[%s1 + $0x48] sm:$0xff]
      %v177 = vld [vmem:[%s1 + $0x50] sm:$0xff]
      %v178 = vld [vmem:[%s1 + $0x58] sm:$0xff]
      %v179 = vld [vmem:[%s1 + $0x60] sm:$0xff]
      %v180 = vld [vmem:[%s1 + $0x68] sm:$0xff]
      %v181 = vld [vmem:[%s1 + $0x70] sm:$0xff]
      %v182 = vld [vmem:[%s1 + $0x78] sm:$0xff]
      %v183 = vld [vmem:[%s2] sm:$0x1]
      %v185 = vlaneseq
      %v186 = vshrl.u32 %v185, 7
      %v187 = vsub.s32 0, %v186
      %v188 = vrot.slane %v183, %v187
      %190 = vmatprep.subr.mxu0 0.0
      %191 = vmatpush1.msra.mxu0 %v167
      %192 = vmatprep.subr.mxu0 0.0
      %193 = vmatpush1.msra.mxu0 %v168
      %194 = vmatprep.subr.mxu0 0.0
      %195 = vmatpush1.msra.mxu0 %v169
      %196 = vmatprep.subr.mxu0 0.0
      %197 = vmatpush1.msra.mxu0 %v170
      %198 = vmatprep.subr.mxu0 0.0
      %199 = vmatpush1.msra.mxu0 %v171
      %200 = vmatprep.subr.mxu0 0.0
      %201 = vmatpush1.msra.mxu0 %v172
      %202 = vmatprep.subr.mxu0 0.0
      %203 = vmatpush1.msra.mxu0 %v173
      %204 = vmatprep.subr.mxu0 0.0
      %205 = vmatpush1.msra.mxu0 %v174
      %206 = vmatprep.subr.mxu0 0.0
      %207 = vmatpush1.msra.mxu0 %v175
      %208 = vmatprep.subr.mxu0 0.0
      %209 = vmatpush1.msra.mxu0 %v176
      %210 = vmatprep.subr.mxu0 0.0
      %211 = vmatpush1.msra.mxu0 %v177
      %212 = vmatprep.subr.mxu0 0.0
      %213 = vmatpush1.msra.mxu0 %v178
      %214 = vmatprep.subr.mxu0 0.0
      %215 = vmatpush1.msra.mxu0 %v179
      %216 = vmatprep.subr.mxu0 0.0
      %217 = vmatpush1.msra.mxu0 %v180
      %218 = vmatprep.subr.mxu0 0.0
      %219 = vmatpush1.msra.mxu0 %v181
      %220 = vmatprep.subr.mxu0 0.0
      %221 = vmatpush1.msra.mxu0 %v182
      %222 = vmatprep.subr.mxu0 0.0
      %223 = vmatpush1.msra.mxu0 0.0
      %224 = vmatprep.subr.mxu0 0.0
      %225 = vmatpush1.msra.mxu0 0.0
      %226 = vmatprep.subr.mxu0 0.0
      %227 = vmatpush1.msra.mxu0 0.0
      %228 = vmatprep.subr.mxu0 0.0
      %229 = vmatpush1.msra.mxu0 0.0
      %230 = vmatprep.subr.mxu0 0.0
      %231 = vmatpush1.msra.mxu0 0.0
      %232 = vmatprep.subr.mxu0 0.0
      %233 = vmatpush1.msra.mxu0 0.0
      %234 = vmatprep.subr.mxu0 0.0
      %235 = vmatpush1.msra.mxu0 0.0
      %236 = vmatprep.subr.mxu0 0.0
      %237 = vmatpush1.msra.mxu0 0.0
      %238 = vmatprep.subr.mxu0 0.0
      %239 = vmatpush1.msra.mxu0 0.0
      %240 = vmatprep.subr.mxu0 0.0
      %241 = vmatpush1.msra.mxu0 0.0
      %242 = vmatprep.subr.mxu0 0.0
      %243 = vmatpush1.msra.mxu0 0.0
      %244 = vmatprep.subr.mxu0 0.0
      %245 = vmatpush1.msra.mxu0 0.0
      %246 = vmatprep.subr.mxu0 0.0
      %247 = vmatpush1.msra.mxu0 0.0
      %248 = vmatprep.subr.mxu0 0.0
      %249 = vmatpush1.msra.mxu0 0.0
      %250 = vmatprep.subr.mxu0 0.0
      %251 = vmatpush1.msra.mxu0 0.0
      %252 = vmatprep.subr.mxu0 0.0
      %253 = vmatpush1.msra.mxu0 0.0
      %254 = vmatprep.mubr.f32.mxu0 0.0
      %255 = vmatmul.mubr.f32.gmra.mrb[0].mxu0 %v166
      %v256 = vpop.f32.mrb[0].mxu0
      %v257 = vadd.f32 %v188, %v256
      %v258 = vpop.f32.mrb[0].mxu0
      %259 = vdwg.mxu0
      %260 = vmax.xlane.f32.xlu0 %v257
      %v261 = vpop.xlane.xlu0 %260
      %v262 = vsub.f32 %v257, %v261
      %v263 = vmul.f32 %v262, 1.442695
      %v264 = vpow.pop %v263
      %265 = vadd.xlane.f32.xlu0 %v264
      %v266 = vpop.xlane.xlu0 %265
      %v267 = vrcp.pop %v266
      %v268 = vmul.f32 %v264, %v267
      %269 = vst [vmem:[%s165] sm:$0xff] %v268
      %p270 = scmp.lt.s32.totalorder %s14, 1
      %s271 = scalar_select %p270, %s14, 1
      %s272 = smul.addr %s271, 8
      %s273 = scalar_lea.vmem %s3, %s272
      // Predicated region
      $region33: #{softmax_readout.1} parent=31 // pred_check
        %p274 = pneg %p100
      $region34: #{softmax_readout.1} parent=31 // pred_check_branch
        %276 = sbr.rel (%p274) target = $region36
      $region35: #{softmax_readout.1} parent=31 // pred_region
        _
      $region36: #{softmax_readout.1} parent=31 // pred_fallthru
        _
    $region32: #{softmax_readout.1} parent=5 // pred_fallthru
      _
    %p277 = scmp.le.s32.totalorder 2, %s9
    // Predicated region
    $region37: #{softmax_readout.1} parent=5 // pred_check
      %p278 = pneg %p277
    $region38: #{softmax_readout.1} parent=5 // pred_check_branch
      %280 = sbr.rel (%p278) target = $region40
    $region39: #{softmax_readout.1} parent=5 // pred_region
      %s281 = ssub.s32 %s9, 2
      // Predicated region
      $region41: #{softmax_readout.1} parent=39 // pred_check
        %p282 = pneg %p106
      $region42: #{softmax_readout.1} parent=39 // pred_check_branch
        %284 = sbr.rel (%p282) target = $region44
      $region43: #{softmax_readout.1} parent=39 // pred_region
        %p285 = scmp.lt.s32.totalorder %s15, 1
        %s286 = scalar_select %p285, %s15, 1
        %s287 = smul.addr %s286, 8
        %s288 = scalar_lea.vmem %s3, %s287
      $region44: #{softmax_readout.1} parent=39 // pred_fallthru
        _
    $region40: #{softmax_readout.1} parent=5 // pred_fallthru
      _
  $region6: #{softmax_readout.1} parent=0 // loop_footer
    %s13 = sadd.s32 1, %s9
  $region7: #{softmax_readout.1} parent=0 // loop_footer_branch
    %8 = sbr.rel target = $region3
  $region8: #{softmax_readout.1} parent=0 // loop_exit
    _

</llo_original>
